<compile_context>
chip_gen: v5e
topology: v5e:2x2
jax: 0.10.0
libtpu: 0.0.40
codegen_flags: <defaults>
</compile_context>

<pallas_src>
import functools

import jax
import jax.numpy as jnp
from jax.experimental import pallas as pl
from jax.experimental.pallas import tpu as pltpu

LANE = 128


def _right_censor_kernel(w_ref, b_ref, xT_ref, t_ref, e_ref, out_ref):
    """One lane-tile of the right-censored NLL.

    w_ref  : (1, D)   VMEM   model weights (row)
    b_ref  : (1, 1)   SMEM   model bias (scalar)
    xT_ref : (D, TN)  VMEM   features, transposed (lane axis = batch)
    t_ref  : (1, TN)  VMEM   event/censor times
    e_ref  : (1, TN)  VMEM   event indicators (1 = event, 0 = right-censored)
    out_ref: (1, TN)  VMEM   per-sample loss
    """
    b = b_ref[0, 0]

    # Model: z = log(rate) = x @ W + b  (MXU, full lane-width output tile).
    z = jnp.dot(w_ref[...], xT_ref[...],
                preferred_element_type=jnp.float32) + b        # (1, TN)
    rate = jnp.exp(z)                                          # single EUP exp

    t = t_ref[...]
    e = e_ref[...]

    # -(e*log(rate) - e*t*rate) - ((1-e) * -(t*rate))
    #   = -e*z + e*t*rate + (1-e)*t*rate
    #   = t*rate - e*z          (exact; log(rate) == z)
    out_ref[...] = t * rate - e * z


def _round_up(a, m):
    return ((a + m - 1) // m) * m


@functools.partial(jax.jit, static_argnames=("tn_max",))
def right_censor_forward(x, w, b, t, e, *, tn_max=2048):
    """Fused forward of RightCensorWrapper(model = linear + exp hazard).

    x: [N, D] features; w: [D, 1]; b: scalar/[1, 1]; t, e: [N, 1] (or [N]).
    Returns the per-sample loss with shape [N, 1] (matching the PyTorch module).
    """
    N, D = x.shape

    # Lane-tile size: as large as possible to amortize the ~0.35 us per-grid-
    # step overhead, capped so the double-buffered x^T tile (plus t/e/out rows)
    # stays well inside VMEM even on v7x (64 MiB).
    n128 = _round_up(N, LANE)
    bytes_per_lane = 4 * (D + 3)                      # x column + t + e + out
    vmem_budget = 8 * 1024 * 1024                     # per buffer set (x2 dbl-buf)
    tn_cap = max(LANE, (vmem_budget // (2 * bytes_per_lane)) // LANE * LANE)
    tn = min(int(tn_max), tn_cap, n128)
    n_pad = _round_up(n128, tn)
    grid = (n_pad // tn,)

    # Padded lanes carry t = e = 0 -> loss = 0, sliced off below.
    pad = n_pad - N
    xT = jnp.pad(x.astype(jnp.float32).T, ((0, 0), (0, pad)))
    t_row = jnp.pad(t.astype(jnp.float32).reshape(1, N), ((0, 0), (0, pad)))
    e_row = jnp.pad(e.astype(jnp.float32).reshape(1, N), ((0, 0), (0, pad)))
    w_row = jnp.asarray(w, jnp.float32).reshape(1, D)
    b_2d = jnp.asarray(b, jnp.float32).reshape(1, 1)

    cost = pl.CostEstimate(
        flops=2 * D * n_pad + 4 * n_pad,
        transcendentals=n_pad,
        bytes_accessed=4 * (D * n_pad + 3 * n_pad + D + 1),
    )

    out_row = pl.pallas_call(
        _right_censor_kernel,
        out_shape=jax.ShapeDtypeStruct((1, n_pad), jnp.float32),
        grid=grid,
        in_specs=[
            pl.BlockSpec((1, D), lambda j: (0, 0)),                 # w (reused)
            pl.BlockSpec(memory_space=pltpu.MemorySpace.SMEM),      # b scalar
            pl.BlockSpec((D, tn), lambda j: (0, j)),                # x^T tile
            pl.BlockSpec((1, tn), lambda j: (0, j)),                # t tile
            pl.BlockSpec((1, tn), lambda j: (0, j)),                # e tile
        ],
        out_specs=pl.BlockSpec((1, tn), lambda j: (0, j)),          # lane-dense
        compiler_params=pltpu.CompilerParams(
            dimension_semantics=("parallel",)),
        cost_estimate=cost,
    )(w_row, b_2d, xT, t_row, e_row)

    return out_row[0, :N].reshape(N, 1)


def _reference(x, w, b, t, e):
    """Pure-JAX reference mirroring the PyTorch RightCensorWrapper exactly."""
    rate = jnp.exp(x @ w + b)                       # model(x)
    log_exact = e * jnp.log(rate) + e * (-(t * rate))
    log_right = (1.0 - e) * (-(rate * t))
    return -log_exact + -log_right


def _make_inputs(key, N, D):
    kx, kw, kb, kt, ke = jax.random.split(key, 5)
    x = jax.random.normal(kx, (N, D), dtype=jnp.float32)
    w = 0.1 * jax.random.normal(kw, (D, 1), dtype=jnp.float32)
    b = 0.1 * jax.random.normal(kb, (1, 1), dtype=jnp.float32)
    t = jnp.abs(jax.random.normal(kt, (N, 1), dtype=jnp.float32)) + 0.1
    e = (jax.random.uniform(ke, (N, 1)) > 0.5).astype(jnp.float32)
    return x, w, b, t, e


if __name__ == "__main__":
    key = jax.random.PRNGKey(0)

    # Small shape consistent with the module: batch (seq) = 8, hidden = 32.
    N, D = 8, 32
    x, w, b, t, e = _make_inputs(key, N, D)
    out = jax.block_until_ready(right_censor_forward(x, w, b, t, e))
    ref = _reference(x, w, b, t, e)
    assert out.shape == (N, 1)
    assert jnp.allclose(out, ref, rtol=1e-5, atol=1e-5), (out, ref)

    # Second check with a non-lane-aligned batch to exercise padding/tiling.
    N2, D2 = 200, 32
    x2, w2, b2, t2, e2 = _make_inputs(jax.random.PRNGKey(1), N2, D2)
    out2 = jax.block_until_ready(right_censor_forward(x2, w2, b2, t2, e2))
    ref2 = _reference(x2, w2, b2, t2, e2)
    assert out2.shape == (N2, 1)
    assert jnp.allclose(out2, ref2, rtol=1e-5, atol=1e-5)

    print("KERNEL_OK")
</pallas_src>

<mosaic_0001>
module attributes {stable_mosaic.version = 11 : i64} {
  func.func @_right_censor_kernel(%arg0: i32, %arg1: memref<1x32xf32, #tpu.memory_space<vmem>>, %arg2: memref<1x1xf32, #tpu.memory_space<smem>>, %arg3: memref<32x128xf32, #tpu.memory_space<vmem>>, %arg4: memref<1x128xf32, #tpu.memory_space<vmem>>, %arg5: memref<1x128xf32, #tpu.memory_space<vmem>>, %arg6: memref<1x128xf32, #tpu.memory_space<vmem>>) attributes {dimension_semantics = [#tpu.dimension_semantics<parallel>], iteration_bounds = array<i64: 1>, scalar_prefetch = 0 : i64, scratch_operands = 0 : i64, tpu.core_type = #tpu.core_type<tc>, window_params = [{pipeline_mode = #tpu.pipeline_mode<synchronous>, transform_indices = @transform_0, window_bounds = array<i64: 1, 32>}, {transform_indices = @transform_1, window_bounds = array<i64: 1, 1>}, {transform_indices = @transform_2, window_bounds = array<i64: 32, 128>}, {transform_indices = @transform_3, window_bounds = array<i64: 1, 128>}, {transform_indices = @transform_4, window_bounds = array<i64: 1, 128>}, {transform_indices = @transform_5, window_bounds = array<i64: 1, 128>}]} {
    %c0 = arith.constant 0 : index
    %c0_0 = arith.constant 0 : index
    %0 = memref.load %arg2[%c0, %c0_0] : memref<1x1xf32, #tpu.memory_space<smem>>
    %c0_1 = arith.constant 0 : index
    %c0_2 = arith.constant 0 : index
    %1 = vector.load %arg1[%c0_1, %c0_2] : memref<1x32xf32, #tpu.memory_space<vmem>>, vector<1x32xf32>
    %c0_3 = arith.constant 0 : index
    %c0_4 = arith.constant 0 : index
    %2 = vector.load %arg3[%c0_3, %c0_4] : memref<32x128xf32, #tpu.memory_space<vmem>>, vector<32x128xf32>
    %cst = arith.constant dense<0.000000e+00> : vector<1x128xf32>
    %3 = tpu.matmul %1, %2, %cst {dimension_numbers = #tpu.dot_dimension_numbers<[1], [0], [0], [1], [0, 0, 1, 1], [], []>} : vector<1x32xf32>, vector<32x128xf32>, vector<1x128xf32> -> vector<1x128xf32>
    %4 = vector.broadcast %0 : f32 to vector<1x128xf32>
    %5 = arith.addf %3, %4 : vector<1x128xf32>
    %6 = math.exp %5 : vector<1x128xf32>
    %c0_5 = arith.constant 0 : index
    %c0_6 = arith.constant 0 : index
    %7 = vector.load %arg4[%c0_5, %c0_6] : memref<1x128xf32, #tpu.memory_space<vmem>>, vector<1x128xf32>
    %c0_7 = arith.constant 0 : index
    %c0_8 = arith.constant 0 : index
    %8 = vector.load %arg5[%c0_7, %c0_8] : memref<1x128xf32, #tpu.memory_space<vmem>>, vector<1x128xf32>
    %9 = arith.mulf %7, %6 : vector<1x128xf32>
    %10 = arith.mulf %8, %5 : vector<1x128xf32>
    %11 = arith.subf %9, %10 : vector<1x128xf32>
    %c0_9 = arith.constant 0 : index
    %c0_10 = arith.constant 0 : index
    %12 = vector.load %arg6[%c0_9, %c0_10] : memref<1x128xf32, #tpu.memory_space<vmem>>, vector<1x128xf32>
    tpu.vector_store %arg6[%c0_9, %c0_10], %11 {strides = array<i32>} : memref<1x128xf32, #tpu.memory_space<vmem>>, vector<1x128xf32>,
    return
  }
  func.func @transform_0(%arg0: i32) -> (i32, i32) {
    %c0_i32 = arith.constant 0 : i32
    %c0_i32_0 = arith.constant 0 : i32
    %c0_i32_1 = arith.constant 0 : i32
    return %c0_i32, %c0_i32_0 : i32, i32
  }
  func.func @transform_1(%arg0: i32) -> (i32, i32) {
    %c0_i32 = arith.constant 0 : i32
    %c0_i32_0 = arith.constant 0 : i32
    %c0_i32_1 = arith.constant 0 : i32
    return %c0_i32, %c0_i32_0 : i32, i32
  }
  func.func @transform_2(%arg0: i32) -> (i32, i32) {
    %c0_i32 = arith.constant 0 : i32
    %c0_i32_0 = arith.constant 0 : i32
    return %c0_i32, %arg0 : i32, i32
  }
  func.func @transform_3(%arg0: i32) -> (i32, i32) {
    %c0_i32 = arith.constant 0 : i32
    %c0_i32_0 = arith.constant 0 : i32
    return %c0_i32, %arg0 : i32, i32
  }
  func.func @transform_4(%arg0: i32) -> (i32, i32) {
    %c0_i32 = arith.constant 0 : i32
    %c0_i32_0 = arith.constant 0 : i32
    return %c0_i32, %arg0 : i32, i32
  }
  func.func @transform_5(%arg0: i32) -> (i32, i32) {
    %c0_i32 = arith.constant 0 : i32
    %c0_i32_0 = arith.constant 0 : i32
    return %c0_i32, %arg0 : i32, i32
  }
}

</mosaic_0001>

<llo_original>
// kernel: right_censor_forward.1
$region0: #{right_censor_forward.1}
  #allocation0 [shape = 'u32[]', space=smem, size = 0x4, offset = 0x4, fixed_abs, tag = 'smem constant byte address 0x4 - core index']
  #allocation1 [shape = 'u32[72,128]{1,0:T(1,128)}', space=vmem, size = 0x9000, scoped, tag = 'internal scratch']
  #allocation2 [shape = 'f32[1,1]{1,0:T(1,128)S(6)}', space=smem, size = 0x200, scoped, tag = 'scoped memory for right_censor_forward.1']
  %s0 = inlined_call_operand.vmem [shape: f32[1,32], index: 0, kind: input, shape index: {}]
  %s1 = inlined_call_operand.<no memory space> [shape: f32[1,1], index: 1, kind: input, shape index: {}]
  %s2 = inlined_call_operand.vmem [shape: f32[32,128], index: 2, kind: input, shape index: {}]
  %s3 = inlined_call_operand.vmem [shape: f32[1,128], index: 3, kind: input, shape index: {}]
  %s4 = inlined_call_operand.vmem [shape: f32[1,128], index: 4, kind: input, shape index: {}]
  %s5 = inlined_call_operand.vmem [shape: f32[1,128], index: 5, kind: output, shape index: {}]
  %s6 = sld [smem:[#allocation0]]
  $region30: #{right_censor_forward.1} parent=0
    _
  %s8 = ssub.s32 1, %s6
  %s9 = scalar_select 0, %s8, %s6
  %10 = sst [smem:[#allocation2]] %s1
  // Predicated region
  $region2: #{right_censor_forward.1} parent=0 // pred_check
    _
  $region3: #{right_censor_forward.1} parent=0 // pred_check_branch
    %12 = sbr.rel (0) target = $region5
  $region4: #{right_censor_forward.1} parent=0 // pred_region
    _
  $region5: #{right_censor_forward.1} parent=0 // pred_fallthru
    _
  // Predicated region
  $region6: #{right_censor_forward.1} parent=0 // pred_check
    _
  $region7: #{right_censor_forward.1} parent=0 // pred_check_branch
    %14 = sbr.rel (0) target = $region9
  $region8: #{right_censor_forward.1} parent=0 // pred_region
    _
  $region9: #{right_censor_forward.1} parent=0 // pred_fallthru
    _
  // Predicated region
  $region10: #{right_censor_forward.1} parent=0 // pred_check
    _
  $region11: #{right_censor_forward.1} parent=0 // pred_check_branch
    %16 = sbr.rel (0) target = $region13
  $region12: #{right_censor_forward.1} parent=0 // pred_region
    _
  $region13: #{right_censor_forward.1} parent=0 // pred_fallthru
    _
  // Predicated region
  $region14: #{right_censor_forward.1} parent=0 // pred_check
    _
  $region15: #{right_censor_forward.1} parent=0 // pred_check_branch
    %18 = sbr.rel (0) target = $region17
  $region16: #{right_censor_forward.1} parent=0 // pred_region
    _
  $region17: #{right_censor_forward.1} parent=0 // pred_fallthru
    _
  // Predicated region
  $region18: #{right_censor_forward.1} parent=0 // pred_check
    _
  $region19: #{right_censor_forward.1} parent=0 // pred_check_branch
    %20 = sbr.rel (0) target = $region21
  $region20: #{right_censor_forward.1} parent=0 // pred_region
    _
  $region21: #{right_censor_forward.1} parent=0 // pred_fallthru
    _
  %s21 = sld [smem:[#allocation2]]
  %v22 = vld [vmem:[%s0] sm:$0x1]
  %v23 = vld [vmem:[%s2] sm:$0xff]
  %v24 = vld [vmem:[%s2 + $0x8] sm:$0xff]
  %v25 = vld [vmem:[%s2 + $0x10] sm:$0xff]
  %v26 = vld [vmem:[%s2 + $0x18] sm:$0xff]
  %v27 = vstv %s21
  %vm28 = vcmask 261120
  %v30 = vsel %vm28, %v22, 0
  %32 = vmatpush.msra.mxu0 0.0
  %33 = vmatpush.msra.mxu0 0.0
  %34 = vmatpush.msra.mxu0 0.0
  %35 = vmatpush.msra.mxu0 0.0
  %36 = vmatpush.msra.mxu0 0.0
  %37 = vmatpush.msra.mxu0 0.0
  %38 = vmatpush.msra.mxu0 0.0
  %39 = vmatpush.msra.mxu0 0.0
  %40 = vmatpush.msra.mxu0 0.0
  %41 = vmatpush.msra.mxu0 0.0
  %42 = vmatpush.msra.mxu0 0.0
  %43 = vmatpush.msra.mxu0 0.0
  %44 = vmatpush.msra.mxu0 %v26
  %45 = vmatpush.msra.mxu0 %v25
  %46 = vmatpush.msra.mxu0 %v24
  %47 = vmatpush.msra.mxu0 %v23
  %48 = vmatmul.f32.gmra.mxu0 %v30
  %v49 = vpop.f32.mrf.mxu0
  %v50 = vadd.f32 %v27, %v49
  %51 = vdwg.mxu0
  %v52 = vmul.f32 %v50, 1.442695
  %v53 = vpow.pop %v52
  %v54 = vld [vmem:[%s3] sm:$0x1]
  %v55 = vld [vmem:[%s4] sm:$0x1]
  %v56 = vmul.f32 %v54, %v53
  %v57 = vmul.f32 %v55, %v50
  %v58 = vsub.f32 %v56, %v57
  %59 = vst [vmem:[%s5] sm:$0x1] %v58
  // Predicated region
  $region22: #{right_censor_forward.1} parent=0 // pred_check
    _
  $region23: #{right_censor_forward.1} parent=0 // pred_check_branch
    %61 = sbr.rel (0) target = $region25
  $region24: #{right_censor_forward.1} parent=0 // pred_region
    _
  $region25: #{right_censor_forward.1} parent=0 // pred_fallthru
    _
  // Predicated region
  $region26: #{right_censor_forward.1} parent=0 // pred_check
    _
  $region27: #{right_censor_forward.1} parent=0 // pred_check_branch
    %63 = sbr.rel (0) target = $region29
  $region28: #{right_censor_forward.1} parent=0 // pred_region
    _
  $region29: #{right_censor_forward.1} parent=0 // pred_fallthru
    _

</llo_original>
